<compile_context>
chip_gen: v5e
topology: v5e:2x2
jax: 0.10.0
libtpu: 0.0.40
codegen_flags: <defaults>
</compile_context>

<pallas_src>
import functools

import jax
import jax.numpy as jnp
import numpy as np
from jax.experimental import pallas as pl
from jax.experimental.pallas import tpu as pltpu

BN_EPS = 1e-5


# ---------------------------------------------------------------------------
# Pallas kernels: tiled matmul with K-axis accumulation + folded-BN epilogue
# ---------------------------------------------------------------------------
def _mm_bias_kernel(x_ref, w_ref, b_ref, o_ref, acc_ref, *, relu):
    """o = [relu](x @ w + b), accumulated over the K grid axis."""
    k = pl.program_id(2)

    @pl.when(k == 0)
    def _():
        acc_ref[...] = jnp.zeros_like(acc_ref)

    acc_ref[...] += jnp.dot(x_ref[...], w_ref[...],
                            preferred_element_type=jnp.float32)

    @pl.when(k == pl.num_programs(2) - 1)
    def _():
        out = acc_ref[...] + b_ref[...]
        if relu:
            out = jnp.maximum(out, 0.0)
        o_ref[...] = out.astype(o_ref.dtype)


def _mm_bias_add_relu_kernel(x_ref, w_ref, b_ref, sc_ref, o_ref, acc_ref):
    """o = relu(x @ w + b + sc)  -- identity residual, sc already [tm, tn]."""
    k = pl.program_id(2)

    @pl.when(k == 0)
    def _():
        acc_ref[...] = jnp.zeros_like(acc_ref)

    acc_ref[...] += jnp.dot(x_ref[...], w_ref[...],
                            preferred_element_type=jnp.float32)

    @pl.when(k == pl.num_programs(2) - 1)
    def _():
        out = acc_ref[...] + b_ref[...] + sc_ref[...].astype(jnp.float32)
        o_ref[...] = jnp.maximum(out, 0.0).astype(o_ref.dtype)


def _mm_bias_proj_add_relu_kernel(x_ref, w_ref, b_ref, sx_ref, sw_ref,
                                  o_ref, acc_ref):
    """o = relu(x @ w + b + sx @ sw)  -- 1x1-conv projection shortcut fused."""
    k = pl.program_id(2)

    @pl.when(k == 0)
    def _():
        acc_ref[...] = jnp.zeros_like(acc_ref)

    acc_ref[...] += jnp.dot(x_ref[...], w_ref[...],
                            preferred_element_type=jnp.float32)

    @pl.when(k == pl.num_programs(2) - 1)
    def _():
        sc = jnp.dot(sx_ref[...], sw_ref[...],
                     preferred_element_type=jnp.float32)
        out = acc_ref[...] + b_ref[...] + sc
        o_ref[...] = jnp.maximum(out, 0.0).astype(o_ref.dtype)


# ---------------------------------------------------------------------------
# Pallas call wrapper (padding, tiling, specs)
# ---------------------------------------------------------------------------
def _round_up(x, m):
    return (x + m - 1) // m * m


def _pad2(a, rows, cols):
    pr, pc = rows - a.shape[0], cols - a.shape[1]
    if pr or pc:
        a = jnp.pad(a, ((0, pr), (0, pc)))
    return a


def _pick_tiles(m, k_pad, c_pad):
    # Lane-dense tiles. 256-wide contraction/output tiles match the 2x256^2
    # MXU on v6e/v7x; small layers (and v5e's 4x128^2 MXU) fall back to 128.
    # tm=256 keeps the double-buffered working set at a few MiB, safely inside
    # the 64 MiB VMEM of v7x (and far inside 128 MiB on v5e/v6e).
    tn = 256 if c_pad % 256 == 0 else 128
    tk = 256 if k_pad % 256 == 0 else 128
    tm = min(256, _round_up(m, 16))
    return tm, tn, tk


def matmul_bn(x, w, bias, *, relu=True, shortcut=None, shortcut_w=None,
              out_dtype=jnp.float32):
    """Fused  [relu](x @ w + bias [+ shortcut])  on the MXU.

    x:    [M, K] activations (cast to bf16 for the MXU).
    w:    [K, C] weights with the BN scale already folded into the columns.
    bias: [C]    folded BN bias (plus shortcut BN bias when fused).
    shortcut:
      * None                              -> no residual term.
      * [M, C]   and shortcut_w is None   -> identity residual added in epilogue.
      * [M, Ks]  with shortcut_w [Ks, C]  -> 1x1-conv projection shortcut,
                                             computed as an extra matmul in the
                                             epilogue of the same kernel.
    """
    M, K = x.shape
    Kw, C = w.shape
    assert Kw == K

    K_pad = _round_up(K, 128)
    C_pad = _round_up(C, 128)
    tm, tn, tk = _pick_tiles(M, K_pad, C_pad)
    M_pad = _round_up(M, tm)

    xp = _pad2(x, M_pad, K_pad).astype(jnp.bfloat16)
    wp = _pad2(w, K_pad, C_pad).astype(jnp.bfloat16)
    bp = _pad2(bias.reshape(1, C).astype(jnp.float32), 1, C_pad)

    grid = (M_pad // tm, C_pad // tn, K_pad // tk)

    x_spec = pl.BlockSpec((tm, tk), lambda i, j, k: (i, k))
    w_spec = pl.BlockSpec((tk, tn), lambda i, j, k: (k, j))
    b_spec = pl.BlockSpec((1, tn), lambda i, j, k: (0, j))
    o_spec = pl.BlockSpec((tm, tn), lambda i, j, k: (i, j))
    scratch = [pltpu.VMEM((tm, tn), jnp.float32)]

    out_itemsize = jnp.dtype(out_dtype).itemsize
    flops = 2 * M_pad * K_pad * C_pad
    bytes_accessed = (2 * (M_pad * K_pad + K_pad * C_pad)
                      + out_itemsize * M_pad * C_pad)

    compiler_params = pltpu.CompilerParams(
        dimension_semantics=("parallel", "parallel", "arbitrary"),
        # Working set (double-buffered bf16 tiles + f32 acc) is only a few
        # MiB, so 32 MiB is ample and safe on every generation, including
        # v7x's 64 MiB physical VMEM.
        vmem_limit_bytes=32 * 1024 * 1024,
    )

    if shortcut is None:
        kernel = functools.partial(_mm_bias_kernel, relu=relu)
        in_specs = [x_spec, w_spec, b_spec]
        operands = (xp, wp, bp)
    elif shortcut_w is None:
        scp = _pad2(shortcut, M_pad, C_pad).astype(jnp.bfloat16)
        kernel = _mm_bias_add_relu_kernel
        in_specs = [x_spec, w_spec, b_spec,
                    pl.BlockSpec((tm, tn), lambda i, j, k: (i, j))]
        operands = (xp, wp, bp, scp)
        bytes_accessed += 2 * M_pad * C_pad
    else:
        Ks = shortcut.shape[1]
        Ks_pad = _round_up(Ks, 128)
        sxp = _pad2(shortcut, M_pad, Ks_pad).astype(jnp.bfloat16)
        swp = _pad2(shortcut_w, Ks_pad, C_pad).astype(jnp.bfloat16)
        kernel = _mm_bias_proj_add_relu_kernel
        in_specs = [x_spec, w_spec, b_spec,
                    pl.BlockSpec((tm, Ks_pad), lambda i, j, k: (i, 0)),
                    pl.BlockSpec((Ks_pad, tn), lambda i, j, k: (0, j))]
        operands = (xp, wp, bp, sxp, swp)
        flops += 2 * M_pad * Ks_pad * C_pad
        bytes_accessed += 2 * (M_pad * Ks_pad + Ks_pad * C_pad)

    out = pl.pallas_call(
        kernel,
        out_shape=jax.ShapeDtypeStruct((M_pad, C_pad), out_dtype),
        grid=grid,
        in_specs=in_specs,
        out_specs=o_spec,
        scratch_shapes=scratch,
        compiler_params=compiler_params,
        cost_estimate=pl.CostEstimate(flops=flops, transcendentals=0,
                                      bytes_accessed=bytes_accessed),
    )(*operands)
    return out[:M, :C]


# ---------------------------------------------------------------------------
# Plain-JAX glue (layout / im2col / parameter folding)
# ---------------------------------------------------------------------------
def im2col(x_nhwc, ksize, stride, pad):
    """[N,H,W,C] -> ([N*Ho*Wo, ksize*ksize*C], Ho, Wo) -- patch order (kh, kw, c)."""
    N, H, W, C = x_nhwc.shape
    xp = jnp.pad(x_nhwc, ((0, 0), (pad, pad), (pad, pad), (0, 0)))
    Ho = (H + 2 * pad - ksize) // stride + 1
    Wo = (W + 2 * pad - ksize) // stride + 1
    cols = []
    for kh in range(ksize):
        for kw in range(ksize):
            cols.append(xp[:, kh:kh + stride * Ho:stride,
                           kw:kw + stride * Wo:stride, :])
    X = jnp.concatenate(cols, axis=-1)  # [N, Ho, Wo, k*k*C]
    return X.reshape(N * Ho * Wo, ksize * ksize * C), Ho, Wo


def conv_weight_to_matrix(w_oihw):
    """PyTorch [Cout, Cin, KH, KW] -> [KH*KW*Cin, Cout] matching im2col order."""
    cout, cin, kh, kw = w_oihw.shape
    return jnp.transpose(w_oihw, (2, 3, 1, 0)).reshape(kh * kw * cin, cout)


def fold_bn_into_weight(w_mat, gamma, beta, mean, var):
    """Fold eval-mode BN (scale) into the matmul weight; return (w_folded, bias)."""
    scale = gamma / jnp.sqrt(var + BN_EPS)          # [C]
    w_folded = w_mat * scale[None, :]               # conv*scale == x @ (w*scale)
    bias = beta - mean * scale                      # [C]
    return w_folded, bias


def basic_block_forward(x_nchw, params, stride):
    out_dtype = x_nchw.dtype
    x = jnp.transpose(x_nchw, (0, 2, 3, 1)).astype(jnp.float32)  # NHWC
    N, H, W, Cin = x.shape
    planes = params["conv1_w"].shape[0]

    # --- conv1 (3x3, stride) + bn1 + relu  -> bf16 intermediate ----------
    X1, Ho, Wo = im2col(x, 3, stride, 1)
    w1 = conv_weight_to_matrix(params["conv1_w"])
    w1f, b1 = fold_bn_into_weight(w1, params["bn1_gamma"], params["bn1_beta"],
                                  params["bn1_mean"], params["bn1_var"])
    out1 = matmul_bn(X1, w1f, b1, relu=True, out_dtype=jnp.bfloat16)

    # --- conv2 (3x3, s=1) + bn2 + residual add + relu (single fused call) -
    out1_nhwc = out1.reshape(N, Ho, Wo, planes)
    X2, _, _ = im2col(out1_nhwc, 3, 1, 1)
    w2 = conv_weight_to_matrix(params["conv2_w"])
    w2f, b2 = fold_bn_into_weight(w2, params["bn2_gamma"], params["bn2_beta"],
                                  params["bn2_mean"], params["bn2_var"])

    if "sc_w" in params:
        # Projection shortcut (1x1 conv, stride) fused into conv2's epilogue.
        xs = x[:, ::stride, ::stride, :].reshape(N * Ho * Wo, Cin)
        wsc = conv_weight_to_matrix(params["sc_w"])
        wscf, bsc = fold_bn_into_weight(wsc, params["bn_sc_gamma"],
                                        params["bn_sc_beta"],
                                        params["bn_sc_mean"],
                                        params["bn_sc_var"])
        out2 = matmul_bn(X2, w2f, b2 + bsc, shortcut=xs, shortcut_w=wscf,
                         out_dtype=out_dtype)
    else:
        # Identity shortcut (stride == 1 and Cin == planes).
        sc = x.reshape(N * Ho * Wo, planes)
        out2 = matmul_bn(X2, w2f, b2, shortcut=sc, out_dtype=out_dtype)

    out = out2.reshape(N, Ho, Wo, planes)
    return jnp.transpose(out, (0, 3, 1, 2))          # back to NCHW


# ---------------------------------------------------------------------------
# Deterministic synthetic parameters (shapes from BasicBlock.__init__)
# ---------------------------------------------------------------------------
def init_params(key, in_planes, planes, stride):
    ks = jax.random.split(key, 16)
    p = {
        "conv1_w": 0.1 * jax.random.normal(ks[0], (planes, in_planes, 3, 3), jnp.float32),
        "bn1_gamma": 1.0 + 0.1 * jax.random.normal(ks[1], (planes,), jnp.float32),
        "bn1_beta": 0.1 * jax.random.normal(ks[2], (planes,), jnp.float32),
        "bn1_mean": 0.05 * jax.random.normal(ks[3], (planes,), jnp.float32),
        "bn1_var": jnp.abs(1.0 + 0.1 * jax.random.normal(ks[4], (planes,), jnp.float32)),
        "conv2_w": 0.1 * jax.random.normal(ks[5], (planes, planes, 3, 3), jnp.float32),
        "bn2_gamma": 1.0 + 0.1 * jax.random.normal(ks[6], (planes,), jnp.float32),
        "bn2_beta": 0.1 * jax.random.normal(ks[7], (planes,), jnp.float32),
        "bn2_mean": 0.05 * jax.random.normal(ks[8], (planes,), jnp.float32),
        "bn2_var": jnp.abs(1.0 + 0.1 * jax.random.normal(ks[9], (planes,), jnp.float32)),
    }
    if stride != 1 or in_planes != planes:  # expansion == 1
        p.update({
            "sc_w": 0.1 * jax.random.normal(ks[10], (planes, in_planes, 1, 1), jnp.float32),
            "bn_sc_gamma": 1.0 + 0.1 * jax.random.normal(ks[11], (planes,), jnp.float32),
            "bn_sc_beta": 0.1 * jax.random.normal(ks[12], (planes,), jnp.float32),
            "bn_sc_mean": 0.05 * jax.random.normal(ks[13], (planes,), jnp.float32),
            "bn_sc_var": jnp.abs(1.0 + 0.1 * jax.random.normal(ks[14], (planes,), jnp.float32)),
        })
    return p


# ---------------------------------------------------------------------------
# Pure-JAX reference (f32, for correctness check)
# ---------------------------------------------------------------------------
def ref_forward(x_nchw, p, stride):
    def conv(x, w, s, pad):
        return jax.lax.conv_general_dilated(
            x, w, (s, s), ((pad, pad), (pad, pad)),
            dimension_numbers=("NCHW", "OIHW", "NCHW"))

    def bn(x, g, b, m, v):
        sc = g / jnp.sqrt(v + BN_EPS)
        bi = b - m * sc
        return x * sc[None, :, None, None] + bi[None, :, None, None]

    out = jax.nn.relu(bn(conv(x_nchw, p["conv1_w"], stride, 1),
                         p["bn1_gamma"], p["bn1_beta"], p["bn1_mean"], p["bn1_var"]))
    out = bn(conv(out, p["conv2_w"], 1, 1),
             p["bn2_gamma"], p["bn2_beta"], p["bn2_mean"], p["bn2_var"])
    if "sc_w" in p:
        sc = bn(conv(x_nchw, p["sc_w"], stride, 0),
                p["bn_sc_gamma"], p["bn_sc_beta"], p["bn_sc_mean"], p["bn_sc_var"])
    else:
        sc = x_nchw
    return jax.nn.relu(out + sc)


if __name__ == "__main__":
    key = jax.random.PRNGKey(0)
    k_x, k_p = jax.random.split(key)

    N, in_planes, H, W = 2, 4, 16, 16
    planes, stride = 8, 2          # exercises the fused projection-shortcut path

    x = jax.random.normal(k_x, (N, in_planes, H, W), jnp.float32)
    params = init_params(k_p, in_planes, planes, stride)

    out = basic_block_forward(x, params, stride)
    out = jax.block_until_ready(out)

    ref = jax.block_until_ready(ref_forward(x, params, stride))
    assert out.shape == (N, planes, H // stride, W // stride), out.shape
    # bf16 MXU inputs -> compare against the f32 reference with a bf16-level tolerance.
    np.testing.assert_allclose(np.asarray(out, dtype=np.float32),
                               np.asarray(ref, dtype=np.float32),
                               rtol=2e-2, atol=2e-2)

    print("KERNEL_OK")
</pallas_src>

<mosaic_0001>
module attributes {stable_mosaic.version = 11 : i64} {
  func.func @_mm_bias_kernel(%arg0: i32, %arg1: i32, %arg2: i32, %arg3: memref<128x128xbf16, #tpu.memory_space<vmem>>, %arg4: memref<128x128xbf16, #tpu.memory_space<vmem>>, %arg5: memref<1x128xf32, #tpu.memory_space<vmem>>, %arg6: memref<128x128xbf16, #tpu.memory_space<vmem>>, %arg7: memref<128x128xf32, #tpu.memory_space<vmem>>) attributes {dimension_semantics = [#tpu.dimension_semantics<parallel>, #tpu.dimension_semantics<parallel>, #tpu.dimension_semantics<arbitrary>], iteration_bounds = array<i64: 1, 1, 1>, scalar_prefetch = 0 : i64, scratch_operands = 1 : i64, tpu.core_type = #tpu.core_type<tc>, window_params = [{transform_indices = @transform_0, window_bounds = array<i64: 128, 128>}, {transform_indices = @transform_1, window_bounds = array<i64: 128, 128>}, {transform_indices = @transform_2, window_bounds = array<i64: 1, 128>}, {transform_indices = @transform_3, window_bounds = array<i64: 128, 128>}]} {
    %c0_i32 = arith.constant 0 : i32
    %0 = arith.cmpi eq, %arg2, %c0_i32 : i32
    %1 = arith.extui %0 : i1 to i32
    %c0_i32_0 = arith.constant 0 : i32
    %2 = arith.cmpi ne, %1, %c0_i32_0 : i32
    scf.if %2 {
      %cst_10 = arith.constant 0.000000e+00 : f32
      %12 = vector.broadcast %cst_10 : f32 to vector<128x128xf32>
      %c0_11 = arith.constant 0 : index
      %c0_12 = arith.constant 0 : index
      %13 = vector.load %arg7[%c0_11, %c0_12] : memref<128x128xf32, #tpu.memory_space<vmem>>, vector<128x128xf32>
      tpu.vector_store %arg7[%c0_11, %c0_12], %12 {strides = array<i32>} : memref<128x128xf32, #tpu.memory_space<vmem>>, vector<128x128xf32>,
    } else {
    }
    %c0 = arith.constant 0 : index
    %c0_1 = arith.constant 0 : index
    %3 = vector.load %arg7[%c0, %c0_1] : memref<128x128xf32, #tpu.memory_space<vmem>>, vector<128x128xf32>
    %c0_2 = arith.constant 0 : index
    %c0_3 = arith.constant 0 : index
    %4 = vector.load %arg3[%c0_2, %c0_3] : memref<128x128xbf16, #tpu.memory_space<vmem>>, vector<128x128xbf16>
    %c0_4 = arith.constant 0 : index
    %c0_5 = arith.constant 0 : index
    %5 = vector.load %arg4[%c0_4, %c0_5] : memref<128x128xbf16, #tpu.memory_space<vmem>>, vector<128x128xbf16>
    %cst = arith.constant dense<0.000000e+00> : vector<128x128xf32>
    %6 = tpu.matmul %4, %5, %cst {dimension_numbers = #tpu.dot_dimension_numbers<[1], [0], [0], [1], [0, 0, 1, 1], [], []>} : vector<128x128xbf16>, vector<128x128xbf16>, vector<128x128xf32> -> vector<128x128xf32>
    %7 = arith.addf %3, %6 : vector<128x128xf32>
    %c0_6 = arith.constant 0 : index
    %c0_7 = arith.constant 0 : index
    %8 = vector.load %arg7[%c0_6, %c0_7] : memref<128x128xf32, #tpu.memory_space<vmem>>, vector<128x128xf32>
    tpu.vector_store %arg7[%c0_6, %c0_7], %7 {strides = array<i32>} : memref<128x128xf32, #tpu.memory_space<vmem>>, vector<128x128xf32>,
    %c0_i32_8 = arith.constant 0 : i32
    %9 = arith.cmpi eq, %arg2, %c0_i32_8 : i32
    %10 = arith.extui %9 : i1 to i32
    %c0_i32_9 = arith.constant 0 : i32
    %11 = arith.cmpi ne, %10, %c0_i32_9 : i32
    scf.if %11 {
      %c0_10 = arith.constant 0 : index
      %c0_11 = arith.constant 0 : index
      %12 = vector.load %arg7[%c0_10, %c0_11] : memref<128x128xf32, #tpu.memory_space<vmem>>, vector<128x128xf32>
      %c0_12 = arith.constant 0 : index
      %c0_13 = arith.constant 0 : index
      %13 = vector.load %arg5[%c0_12, %c0_13] : memref<1x128xf32, #tpu.memory_space<vmem>>, vector<1x128xf32>
      %14 = vector.broadcast %13 : vector<1x128xf32> to vector<128x128xf32>
      %15 = arith.addf %12, %14 : vector<128x128xf32>
      %cst_14 = arith.constant 0.000000e+00 : f32
      %16 = vector.broadcast %cst_14 : f32 to vector<128x128xf32>
      %17 = arith.maximumf %15, %16 : vector<128x128xf32>
      %18 = arith.truncf %17 : vector<128x128xf32> to vector<128x128xbf16>
      %c0_15 = arith.constant 0 : index
      %c0_16 = arith.constant 0 : index
      %19 = vector.load %arg6[%c0_15, %c0_16] : memref<128x128xbf16, #tpu.memory_space<vmem>>, vector<128x128xbf16>
      tpu.vector_store %arg6[%c0_15, %c0_16], %18 {strides = array<i32>} : memref<128x128xbf16, #tpu.memory_space<vmem>>, vector<128x128xbf16>,
    } else {
    }
    return
  }
  func.func @transform_0(%arg0: i32, %arg1: i32, %arg2: i32) -> (i32, i32) {
    %c0_i32 = arith.constant 0 : i32
    return %arg0, %arg2 : i32, i32
  }
  func.func @transform_1(%arg0: i32, %arg1: i32, %arg2: i32) -> (i32, i32) {
    %c0_i32 = arith.constant 0 : i32
    return %arg2, %arg1 : i32, i32
  }
  func.func @transform_2(%arg0: i32, %arg1: i32, %arg2: i32) -> (i32, i32) {
    %c0_i32 = arith.constant 0 : i32
    %c0_i32_0 = arith.constant 0 : i32
    return %c0_i32, %arg1 : i32, i32
  }
  func.func @transform_3(%arg0: i32, %arg1: i32, %arg2: i32) -> (i32, i32) {
    %c0_i32 = arith.constant 0 : i32
    return %arg0, %arg1 : i32, i32
  }
}

</mosaic_0001>

<llo_original>
// kernel: tpu_custom_call.1
$region0: #{tpu_custom_call.1}
  #allocation0 [shape = 'u32[]', space=smem, size = 0x4, offset = 0x4, fixed_abs, tag = 'smem constant byte address 0x4 - core index']
  #allocation1 [shape = 'u32[72,128]{1,0:T(1,128)}', space=vmem, size = 0x9000, scoped, tag = 'internal scratch']
  #allocation2 [shape = 'f32[128,128]{1,0:T(8,128)}', space=vmem, size = 0x10000, scoped, tag = 'scratch operand']
  %s0 = inlined_call_operand.hbm [shape: bf16[128,128], index: 0, kind: input, shape index: {}]
  %s1 = inlined_call_operand.hbm [shape: bf16[128,128], index: 1, kind: input, shape index: {}]
  %s2 = inlined_call_operand.vmem [shape: f32[1,128], index: 2, kind: input, shape index: {}]
  %s3 = inlined_call_operand.hbm [shape: bf16[128,128], index: 3, kind: output, shape index: {}]
  %s4 = sld [smem:[#allocation0]]
  $region38: #{tpu_custom_call.1} parent=0
    _
  %s6 = ssub.s32 1, %s4
  %s7 = scalar_select 0, %s6, %s4
  $region1: #{tpu_custom_call.1} parent=0
    #allocation3 [shape = 'u8[32768]{0}', space=vmem, size = 0x8000, scoped, tag = 'input window, operand 0, single buffered']
    #allocation4 [shape = 's32[1]{0}', space=sflag, size = 0x4, scoped, tag = 'scoped memory for tpu_custom_call.1']
    #allocation5 [shape = 's32[1]{0}', space=sflag, size = 0x4, scoped, tag = 'scoped memory for tpu_custom_call.1']
    #allocation6 [shape = 'u8[32768]{0}', space=vmem, size = 0x8000, scoped, tag = 'input window, operand 1, single buffered']
    #allocation7 [shape = 's32[1]{0}', space=sflag, size = 0x4, scoped, tag = 'scoped memory for tpu_custom_call.1']
    #allocation8 [shape = 'u8[32768]{0}', space=vmem, size = 0x8000, scoped, tag = 'output window, operand 0, single buffered']
    %8 = vsyncpa [#allocation4], 0
    %9 = vsyncpa [#allocation7], 0
    %10 = vsyncpa [#allocation5], 0
    // Predicated region
    $region2: #{tpu_custom_call.1} parent=1 // pred_check
      _
    $region3: #{tpu_custom_call.1} parent=1 // pred_check_branch
      %12 = sbr.rel (0) target = $region5
    $region4: #{tpu_custom_call.1} parent=1 // pred_region
      %14 = vsyncadd [#allocation4], 0
      %s15 = sshll.u32 %s0, 4
      %s16 = int_to_ptr.hbm [resolvable:$true] %s15
      %s17 = sshll.u32 [#allocation3], 4
      %s18 = int_to_ptr.vmem [resolvable:$true] %s17
      %23 = dma.hbm_to_vmem [thread:$0]  %s16, 1024, %s18, [#allocation4], 64, 64, 4
    $region5: #{tpu_custom_call.1} parent=1 // pred_fallthru
      _
    // Predicated region
    $region6: #{tpu_custom_call.1} parent=1 // pred_check
      _
    $region7: #{tpu_custom_call.1} parent=1 // pred_check_branch
      %25 = sbr.rel (0) target = $region9
    $region8: #{tpu_custom_call.1} parent=1 // pred_region
      %27 = vsyncadd [#allocation7], 0
      %s28 = sshll.u32 %s1, 4
      %s29 = int_to_ptr.hbm [resolvable:$true] %s28
      %s30 = sshll.u32 [#allocation6], 4
      %s31 = int_to_ptr.vmem [resolvable:$true] %s30
      %36 = dma.hbm_to_vmem [thread:$0]  %s29, 1024, %s31, [#allocation7], 64, 64, 4
    $region9: #{tpu_custom_call.1} parent=1 // pred_fallthru
      _
    // Predicated region
    $region10: #{tpu_custom_call.1} parent=1 // pred_check
      _
    $region11: #{tpu_custom_call.1} parent=1 // pred_check_branch
      %38 = sbr.rel (0) target = $region13
    $region12: #{tpu_custom_call.1} parent=1 // pred_region
      _
    $region13: #{tpu_custom_call.1} parent=1 // pred_fallthru
      _
    // Predicated region
    $region14: #{tpu_custom_call.1} parent=1 // pred_check
      _
    $region15: #{tpu_custom_call.1} parent=1 // pred_check_branch
      %40 = sbr.rel (0) target = $region17
    $region16: #{tpu_custom_call.1} parent=1 // pred_region
      %42 = dma.done [#allocation4], 1024
    $region17: #{tpu_custom_call.1} parent=1 // pred_fallthru
      _
    // Predicated region
    $region18: #{tpu_custom_call.1} parent=1 // pred_check
      _
    $region19: #{tpu_custom_call.1} parent=1 // pred_check_branch
      %44 = sbr.rel (0) target = $region21
    $region20: #{tpu_custom_call.1} parent=1 // pred_region
      %46 = dma.done [#allocation7], 1024
    $region21: #{tpu_custom_call.1} parent=1 // pred_fallthru
      _
    %p47 = scmp.eq.s32.totalorder 0, 0
    // Predicated region
    $region22: #{tpu_custom_call.1} parent=1 // pred_check
      %p48 = pneg %p47
    $region23: #{tpu_custom_call.1} parent=1 // pred_check_branch
      %50 = sbr.rel (%p48) target = $region25
    $region24: #{tpu_custom_call.1} parent=1 // pred_region
      %51 = vst [vmem:[#allocation2] sm:$0xff] 0.0
      %52 = vst [vmem:[#allocation2 + $0x8] sm:$0xff] 0.0
      %53 = vst [vmem:[#allocation2 + $0x10] sm:$0xff] 0.0
      %54 = vst [vmem:[#allocation2 + $0x18] sm:$0xff] 0.0
      %55 = vst [vmem:[#allocation2 + $0x20] sm:$0xff] 0.0
      %56 = vst [vmem:[#allocation2 + $0x28] sm:$0xff] 0.0
      %57 = vst [vmem:[#allocation2 + $0x30] sm:$0xff] 0.0
      %58 = vst [vmem:[#allocation2 + $0x38] sm:$0xff] 0.0
      %59 = vst [vmem:[#allocation2 + $0x40] sm:$0xff] 0.0
      %60 = vst [vmem:[#allocation2 + $0x48] sm:$0xff] 0.0
      %61 = vst [vmem:[#allocation2 + $0x50] sm:$0xff] 0.0
      %62 = vst [vmem:[#allocation2 + $0x58] sm:$0xff] 0.0
      %63 = vst [vmem:[#allocation2 + $0x60] sm:$0xff] 0.0
      %64 = vst [vmem:[#allocation2 + $0x68] sm:$0xff] 0.0
      %65 = vst [vmem:[#allocation2 + $0x70] sm:$0xff] 0.0
      %66 = vst [vmem:[#allocation2 + $0x78] sm:$0xff] 0.0
    $region25: #{tpu_custom_call.1} parent=1 // pred_fallthru
      _
    %v67 = vld [vmem:[#allocation2] sm:$0xff]
    %v68 = vld [vmem:[#allocation2 + $0x8] sm:$0xff]
    %v69 = vld [vmem:[#allocation2 + $0x10] sm:$0xff]
    %v70 = vld [vmem:[#allocation2 + $0x18] sm:$0xff]
    %v71 = vld [vmem:[#allocation2 + $0x20] sm:$0xff]
    %v72 = vld [vmem:[#allocation2 + $0x28] sm:$0xff]
    %v73 = vld [vmem:[#allocation2 + $0x30] sm:$0xff]
    %v74 = vld [vmem:[#allocation2 + $0x38] sm:$0xff]
    %v75 = vld [vmem:[#allocation2 + $0x40] sm:$0xff]
    %v76 = vld [vmem:[#allocation2 + $0x48] sm:$0xff]
    %v77 = vld [vmem:[#allocation2 + $0x50] sm:$0xff]
    %v78 = vld [vmem:[#allocation2 + $0x58] sm:$0xff]
    %v79 = vld [vmem:[#allocation2 + $0x60] sm:$0xff]
    %v80 = vld [vmem:[#allocation2 + $0x68] sm:$0xff]
    %v81 = vld [vmem:[#allocation2 + $0x70] sm:$0xff]
    %v82 = vld [vmem:[#allocation2 + $0x78] sm:$0xff]
    %v83 = vld [vmem:[#allocation3] sm:$0xf]
    %v84 = vld [vmem:[#allocation3 + $0x4] sm:$0xf]
    %v85 = vld [vmem:[#allocation3 + $0x8] sm:$0xf]
    %v86 = vld [vmem:[#allocation3 + $0xc] sm:$0xf]
    %v87 = vld [vmem:[#allocation3 + $0x10] sm:$0xf]
    %v88 = vld [vmem:[#allocation3 + $0x14] sm:$0xf]
    %v89 = vld [vmem:[#allocation3 + $0x18] sm:$0xf]
    %v90 = vld [vmem:[#allocation3 + $0x1c] sm:$0xf]
    %v91 = vld [vmem:[#allocation3 + $0x20] sm:$0xf]
    %v92 = vld [vmem:[#allocation3 + $0x24] sm:$0xf]
    %v93 = vld [vmem:[#allocation3 + $0x28] sm:$0xf]
    %v94 = vld [vmem:[#allocation3 + $0x2c] sm:$0xf]
    %v95 = vld [vmem:[#allocation3 + $0x30] sm:$0xf]
    %v96 = vld [vmem:[#allocation3 + $0x34] sm:$0xf]
    %v97 = vld [vmem:[#allocation3 + $0x38] sm:$0xf]
    %v98 = vld [vmem:[#allocation3 + $0x3c] sm:$0xf]
    %v99 = vld [vmem:[#allocation6] sm:$0xf]
    %v100 = vld [vmem:[#allocation6 + $0x4] sm:$0xf]
    %v101 = vld [vmem:[#allocation6 + $0x8] sm:$0xf]
    %v102 = vld [vmem:[#allocation6 + $0xc] sm:$0xf]
    %v103 = vld [vmem:[#allocation6 + $0x10] sm:$0xf]
    %v104 = vld [vmem:[#allocation6 + $0x14] sm:$0xf]
    %v105 = vld [vmem:[#allocation6 + $0x18] sm:$0xf]
    %v106 = vld [vmem:[#allocation6 + $0x1c] sm:$0xf]
    %v107 = vld [vmem:[#allocation6 + $0x20] sm:$0xf]
    %v108 = vld [vmem:[#allocation6 + $0x24] sm:$0xf]
    %v109 = vld [vmem:[#allocation6 + $0x28] sm:$0xf]
    %v110 = vld [vmem:[#allocation6 + $0x2c] sm:$0xf]
    %v111 = vld [vmem:[#allocation6 + $0x30] sm:$0xf]
    %v112 = vld [vmem:[#allocation6 + $0x34] sm:$0xf]
    %v113 = vld [vmem:[#allocation6 + $0x38] sm:$0xf]
    %v114 = vld [vmem:[#allocation6 + $0x3c] sm:$0xf]
    %v131 = vunpack.c.l.b16 %v83
    %v132 = vunpack.c.l.b16 %v84
    %v133 = vunpack.c.l.b16 %v85
    %v134 = vunpack.c.l.b16 %v86
    %v135 = vunpack.c.l.b16 %v87
    %v136 = vunpack.c.l.b16 %v88
    %v137 = vunpack.c.l.b16 %v89
    %v138 = vunpack.c.l.b16 %v90
    %v139 = vunpack.c.l.b16 %v91
    %v140 = vunpack.c.l.b16 %v92
    %v141 = vunpack.c.l.b16 %v93
    %v142 = vunpack.c.l.b16 %v94
    %v143 = vunpack.c.l.b16 %v95
    %v144 = vunpack.c.l.b16 %v96
    %v145 = vunpack.c.l.b16 %v97
    %v146 = vunpack.c.l.b16 %v98
    %v147 = vpack.c.b16 %v132, %v131
    %v148 = vpack.c.b16 %v134, %v133
    %v149 = vpack.c.b16 %v136, %v135
    %v150 = vpack.c.b16 %v138, %v137
    %v151 = vpack.c.b16 %v140, %v139
    %v152 = vpack.c.b16 %v142, %v141
    %v153 = vpack.c.b16 %v144, %v143
    %v154 = vpack.c.b16 %v146, %v145
    %v179 = vunpack.c.l.b16 %v99
    %v180 = vunpack.c.l.b16 %v100
    %v181 = vunpack.c.l.b16 %v101
    %v182 = vunpack.c.l.b16 %v102
    %v183 = vunpack.c.l.b16 %v103
    %v184 = vunpack.c.l.b16 %v104
    %v185 = vunpack.c.l.b16 %v105
    %v186 = vunpack.c.l.b16 %v106
    %v187 = vunpack.c.l.b16 %v107
    %v188 = vunpack.c.l.b16 %v108
    %v189 = vunpack.c.l.b16 %v109
    %v190 = vunpack.c.l.b16 %v110
    %v191 = vunpack.c.l.b16 %v111
    %v192 = vunpack.c.l.b16 %v112
    %v193 = vunpack.c.l.b16 %v113
    %v194 = vunpack.c.l.b16 %v114
    %v195 = vpack.c.b16 %v180, %v179
    %v196 = vpack.c.b16 %v182, %v181
    %v197 = vpack.c.b16 %v184, %v183
    %v198 = vpack.c.b16 %v186, %v185
    %v199 = vpack.c.b16 %v188, %v187
    %v200 = vpack.c.b16 %v190, %v189
    %v201 = vpack.c.b16 %v192, %v191
    %v202 = vpack.c.b16 %v194, %v193
    %211 = vmatpush.bf16.msra.mxu0 %v202
    %212 = vmatpush.bf16.msra.mxu0 %v201
    %213 = vmatpush.bf16.msra.mxu0 %v200
    %214 = vmatpush.bf16.msra.mxu0 %v199
    %215 = vmatpush.bf16.msra.mxu0 %v198
    %216 = vmatpush.bf16.msra.mxu0 %v197
    %217 = vmatpush.bf16.msra.mxu0 %v196
    %218 = vmatpush.bf16.msra.mxu0 %v195
    %219 = vmatmul.bf16.gmra.mxu0 %v147
    %v220 = vpop.f32.mrf.mxu0
    %v221 = vadd.f32 0.0, %v220
    %v222 = vpop.f32.mrf.mxu0
    %v223 = vadd.f32 0.0, %v222
    %224 = vmatmul.bf16.gmra.mxu0 %v148
    %v225 = vpop.f32.mrf.mxu0
    %v226 = vadd.f32 0.0, %v225
    %v227 = vpop.f32.mrf.mxu0
    %v228 = vadd.f32 0.0, %v227
    %229 = vmatmul.bf16.gmra.mxu0 %v149
    %v230 = vpop.f32.mrf.mxu0
    %v231 = vadd.f32 0.0, %v230
    %v232 = vpop.f32.mrf.mxu0
    %v233 = vadd.f32 0.0, %v232
    %234 = vmatmul.bf16.gmra.mxu0 %v150
    %v235 = vpop.f32.mrf.mxu0
    %v236 = vadd.f32 0.0, %v235
    %v237 = vpop.f32.mrf.mxu0
    %v238 = vadd.f32 0.0, %v237
    %239 = vmatmul.bf16.gmra.mxu0 %v151
    %v240 = vpop.f32.mrf.mxu0
    %v241 = vadd.f32 0.0, %v240
    %v242 = vpop.f32.mrf.mxu0
    %v243 = vadd.f32 0.0, %v242
    %244 = vmatmul.bf16.gmra.mxu0 %v152
    %v245 = vpop.f32.mrf.mxu0
    %v246 = vadd.f32 0.0, %v245
    %v247 = vpop.f32.mrf.mxu0
    %v248 = vadd.f32 0.0, %v247
    %249 = vmatmul.bf16.gmra.mxu0 %v153
    %v250 = vpop.f32.mrf.mxu0
    %v251 = vadd.f32 0.0, %v250
    %v252 = vpop.f32.mrf.mxu0
    %v253 = vadd.f32 0.0, %v252
    %254 = vmatmul.bf16.gmra.mxu0 %v154
    %v255 = vpop.f32.mrf.mxu0
    %v256 = vadd.f32 0.0, %v255
    %v257 = vpop.f32.mrf.mxu0
    %v258 = vadd.f32 0.0, %v257
    %259 = vdwg.mxu0
    %v260 = vadd.f32 %v67, %v221
    %v261 = vadd.f32 %v68, %v223
    %v262 = vadd.f32 %v69, %v226
    %v263 = vadd.f32 %v70, %v228
    %v264 = vadd.f32 %v71, %v231
    %v265 = vadd.f32 %v72, %v233
    %v266 = vadd.f32 %v73, %v236
    %v267 = vadd.f32 %v74, %v238
    %v268 = vadd.f32 %v75, %v241
    %v269 = vadd.f32 %v76, %v243
    %v270 = vadd.f32 %v77, %v246
    %v271 = vadd.f32 %v78, %v248
    %v272 = vadd.f32 %v79, %v251
    %v273 = vadd.f32 %v80, %v253
    %v274 = vadd.f32 %v81, %v256
    %v275 = vadd.f32 %v82, %v258
    %276 = vst [vmem:[#allocation2] sm:$0xff] %v260
    %277 = vst [vmem:[#allocation2 + $0x8] sm:$0xff] %v261
    %278 = vst [vmem:[#allocation2 + $0x10] sm:$0xff] %v262
    %279 = vst [vmem:[#allocation2 + $0x18] sm:$0xff] %v263
    %280 = vst [vmem:[#allocation2 + $0x20] sm:$0xff] %v264
    %281 = vst [vmem:[#allocation2 + $0x28] sm:$0xff] %v265
    %282 = vst [vmem:[#allocation2 + $0x30] sm:$0xff] %v266
    %283 = vst [vmem:[#allocation2 + $0x38] sm:$0xff] %v267
    %284 = vst [vmem:[#allocation2 + $0x40] sm:$0xff] %v268
    %285 = vst [vmem:[#allocation2 + $0x48] sm:$0xff] %v269
    %286 = vst [vmem:[#allocation2 + $0x50] sm:$0xff] %v270
    %287 = vst [vmem:[#allocation2 + $0x58] sm:$0xff] %v271
    %288 = vst [vmem:[#allocation2 + $0x60] sm:$0xff] %v272
    %289 = vst [vmem:[#allocation2 + $0x68] sm:$0xff] %v273
    %290 = vst [vmem:[#allocation2 + $0x70] sm:$0xff] %v274
    %291 = vst [vmem:[#allocation2 + $0x78] sm:$0xff] %v275
    // Predicated region
    $region26: #{tpu_custom_call.1} parent=1 // pred_check
      %p292 = pneg %p47
    $region27: #{tpu_custom_call.1} parent=1 // pred_check_branch
      %294 = sbr.rel (%p292) target = $region29
    $region28: #{tpu_custom_call.1} parent=1 // pred_region
      %v295 = vld [vmem:[#allocation2] sm:$0xff]
      %v296 = vld [vmem:[#allocation2 + $0x8] sm:$0xff]
      %v297 = vld [vmem:[#allocation2 + $0x10] sm:$0xff]
      %v298 = vld [vmem:[#allocation2 + $0x18] sm:$0xff]
      %v299 = vld [vmem:[#allocation2 + $0x20] sm:$0xff]
      %v300 = vld [vmem:[#allocation2 + $0x28] sm:$0xff]
      %v301 = vld [vmem:[#allocation2 + $0x30] sm:$0xff]
      %v302 = vld [vmem:[#allocation2 + $0x38] sm:$0xff]
      %v303 = vld [vmem:[#allocation2 + $0x40] sm:$0xff]
      %v304 = vld [vmem:[#allocation2 + $0x48] sm:$0xff]
      %v305 = vld [vmem:[#allocation2 + $0x50] sm:$0xff]
      %v306 = vld [vmem:[#allocation2 + $0x58] sm:$0xff]
      %v307 = vld [vmem:[#allocation2 + $0x60] sm:$0xff]
      %v308 = vld [vmem:[#allocation2 + $0x68] sm:$0xff]
      %v309 = vld [vmem:[#allocation2 + $0x70] sm:$0xff]
      %v310 = vld [vmem:[#allocation2 + $0x78] sm:$0xff]
      %v311 = vld [vmem:[%s2] sm:$0x1]
      %v313 = vperm.slane %v311, 0
      %v315 = vadd.f32 %v295, %v313
      %v316 = vadd.f32 %v296, %v313
      %v317 = vadd.f32 %v297, %v313
      %v318 = vadd.f32 %v298, %v313
      %v319 = vadd.f32 %v299, %v313
      %v320 = vadd.f32 %v300, %v313
      %v321 = vadd.f32 %v301, %v313
      %v322 = vadd.f32 %v302, %v313
      %v323 = vadd.f32 %v303, %v313
      %v324 = vadd.f32 %v304, %v313
      %v325 = vadd.f32 %v305, %v313
      %v326 = vadd.f32 %v306, %v313
      %v327 = vadd.f32 %v307, %v313
      %v328 = vadd.f32 %v308, %v313
      %v329 = vadd.f32 %v309, %v313
      %v330 = vadd.f32 %v310, %v313
      %v331 = vmax.f32 %v315, 0.0
      %v332 = vmax.f32 %v316, 0.0
      %v333 = vmax.f32 %v317, 0.0
      %v334 = vmax.f32 %v318, 0.0
      %v335 = vmax.f32 %v319, 0.0
      %v336 = vmax.f32 %v320, 0.0
      %v337 = vmax.f32 %v321, 0.0
      %v338 = vmax.f32 %v322, 0.0
      %v339 = vmax.f32 %v323, 0.0
      %v340 = vmax.f32 %v324, 0.0
      %v341 = vmax.f32 %v325, 0.0
      %v342 = vmax.f32 %v326, 0.0
      %v343 = vmax.f32 %v327, 0.0
      %v344 = vmax.f32 %v328, 0.0
      %v345 = vmax.f32 %v329, 0.0
      %v346 = vmax.f32 %v330, 0.0
      %v347 = vpack.c.bf16 %v331, %v331
      %v348 = vpack.c.bf16 %v332, %v332
      %v349 = vpack.c.bf16 %v333, %v333
      %v350 = vpack.c.bf16 %v334, %v334
      %v351 = vpack.c.bf16 %v335, %v335
      %v352 = vpack.c.bf16 %v336, %v336
      %v353 = vpack.c.bf16 %v337, %v337
      %v354 = vpack.c.bf16 %v338, %v338
      %v355 = vpack.c.bf16 %v339, %v339
      %v356 = vpack.c.bf16 %v340, %v340
      %v357 = vpack.c.bf16 %v341, %v341
      %v358 = vpack.c.bf16 %v342, %v342
      %v359 = vpack.c.bf16 %v343, %v343
      %v360 = vpack.c.bf16 %v344, %v344
      %v361 = vpack.c.bf16 %v345, %v345
      %v362 = vpack.c.bf16 %v346, %v346
      %363 = vst [vmem:[#allocation8] sm:$0xf] %v347
      %364 = vst [vmem:[#allocation8 + $0x4] sm:$0xf] %v348
      %365 = vst [vmem:[#allocation8 + $0x8] sm:$0xf] %v349
      %366 = vst [vmem:[#allocation8 + $0xc] sm:$0xf] %v350
      %367 = vst [vmem:[#allocation8 + $0x10] sm:$0xf] %v351
      %368 = vst [vmem:[#allocation8 + $0x14] sm:$0xf] %v352
      %369 = vst [vmem:[#allocation8 + $0x18] sm:$0xf] %v353
      %370 = vst [vmem:[#allocation8 + $0x1c] sm:$0xf] %v354
      %371 = vst [vmem:[#allocation8 + $0x20] sm:$0xf] %v355
      %372 = vst [vmem:[#allocation8 + $0x24] sm:$0xf] %v356
      %373 = vst [vmem:[#allocation8 + $0x28] sm:$0xf] %v357
      %374 = vst [vmem:[#allocation8 + $0x2c] sm:$0xf] %v358
      %375 = vst [vmem:[#allocation8 + $0x30] sm:$0xf] %v359
      %376 = vst [vmem:[#allocation8 + $0x34] sm:$0xf] %v360
      %377 = vst [vmem:[#allocation8 + $0x38] sm:$0xf] %v361
      %378 = vst [vmem:[#allocation8 + $0x3c] sm:$0xf] %v362
    $region29: #{tpu_custom_call.1} parent=1 // pred_fallthru
      _
    // Predicated region
    $region30: #{tpu_custom_call.1} parent=1 // pred_check
      _
    $region31: #{tpu_custom_call.1} parent=1 // pred_check_branch
      %380 = sbr.rel (0) target = $region33
    $region32: #{tpu_custom_call.1} parent=1 // pred_region
      %382 = vsyncadd [#allocation5], 0
      %s383 = sshll.u32 [#allocation8], 4
      %s384 = int_to_ptr.vmem [resolvable:$true] %s383
      %s385 = sshll.u32 %s3, 4
      %s386 = int_to_ptr.hbm [resolvable:$true] %s385
      %391 = dma.vmem_to_hbm [thread:$0]  %s384, 1024, %s386, [#allocation5], 64, 64, 4
    $region33: #{tpu_custom_call.1} parent=1 // pred_fallthru
      _
    // Predicated region
    $region34: #{tpu_custom_call.1} parent=1 // pred_check
      _
    $region35: #{tpu_custom_call.1} parent=1 // pred_check_branch
      %393 = sbr.rel (0) target = $region37
    $region36: #{tpu_custom_call.1} parent=1 // pred_region
      %395 = dma.done [#allocation5], 1024
    $region37: #{tpu_custom_call.1} parent=1 // pred_fallthru
      _
    %396 = vsyncpa [#allocation4], 1
    %397 = vsyncpa [#allocation7], 1
    %398 = vsyncpa [#allocation5], 1

</llo_original>
